<compile_context>
chip_gen: v6e
topology: v6e:2x2x1
jax: 0.10.0
libtpu: 0.0.40
codegen_flags: <defaults>
</compile_context>

<pallas_src>
import functools

import jax
import jax.numpy as jnp
from jax.experimental import pallas as pl
from jax.experimental.pallas import tpu as pltpu

HIDDEN = 64
SUBLANE = 8          # f32 sublane granularity -> batch tile multiple


def _round_up(n, m):
    return ((n + m - 1) // m) * m


def _mlp_kernel(x_ref, w1_ref, b1_ref, w2_ref, b2_ref, w3_ref, b3_ref, o_ref):
    # x tile [TB, F] f32; weights/biases f32 and resident across grid steps.
    x = x_ref[...]

    # fc1 + relu
    h1 = jnp.dot(x, w1_ref[...], preferred_element_type=jnp.float32)
    h1 = jnp.maximum(h1 + b1_ref[...], 0.0)                  # [TB,64] + [1,64]

    # fc2 + relu
    h2 = jnp.dot(h1, w2_ref[...], preferred_element_type=jnp.float32)
    h2 = jnp.maximum(h2 + b2_ref[...], 0.0)

    # fc3 (no activation), narrow [TB, targets] store
    out = jnp.dot(h2, w3_ref[...], preferred_element_type=jnp.float32)
    o_ref[...] = (out + b3_ref[...]).astype(o_ref.dtype)


@functools.partial(jax.jit, static_argnames=("block_rows",))
def pump_frequency_forward(x, params, *, block_rows=1024):
    """x: [B, features] float32. params: dict of transposed weights / biases."""
    w1, b1 = params["w1"], params["b1"]
    w2, b2 = params["w2"], params["b2"]
    w3, b3 = params["w3"], params["b3"]

    batch, features = x.shape
    targets = w3.shape[1]

    # --- batch tiling ---------------------------------------------------------
    rows = _round_up(batch, SUBLANE)                 # minimal padded batch
    # keep >= 2 grid blocks whenever possible so v7x megacore gets both cores
    n_blocks = max(pl.cdiv(rows, block_rows), 2 if rows >= 2 * SUBLANE else 1)
    tb = _round_up(pl.cdiv(rows, n_blocks), SUBLANE)
    n_blocks = pl.cdiv(rows, tb)
    b_pad = n_blocks * tb
    if b_pad != batch:
        x = jnp.pad(x, ((0, b_pad - batch), (0, 0)))

    x_spec = pl.BlockSpec((tb, features), lambda i: (i, 0))
    out_spec = pl.BlockSpec((tb, targets), lambda i: (i, 0))
    resident = lambda a: pl.BlockSpec(a.shape, lambda i: (0, 0))

    flops = 2 * b_pad * (features * HIDDEN + HIDDEN * HIDDEN + HIDDEN * targets)
    bytes_accessed = 4 * (
        b_pad * features + b_pad * targets
        + w1.size + w2.size + w3.size + b1.size + b2.size + b3.size
    )

    out = pl.pallas_call(
        _mlp_kernel,
        out_shape=jax.ShapeDtypeStruct((b_pad, targets), jnp.float32),
        grid=(n_blocks,),
        in_specs=[
            x_spec,
            resident(w1), resident(b1),
            resident(w2), resident(b2),
            resident(w3), resident(b3),
        ],
        out_specs=out_spec,
        compiler_params=pltpu.CompilerParams(
            dimension_semantics=("parallel",),        # megacore on v7x
            vmem_limit_bytes=32 * 1024 * 1024,        # safe on v5e/v6e/v7x
        ),
        cost_estimate=pl.CostEstimate(
            flops=flops, transcendentals=0, bytes_accessed=bytes_accessed),
    )(x, w1, b1, w2, b2, w3, b3)

    return out[:batch, :]


def init_params(key, features, targets):
    """PyTorch-style init U(-1/sqrt(fan_in), 1/sqrt(fan_in)); W stored [in, out]."""
    def linear(k, fan_in, fan_out):
        kw, kb = jax.random.split(k)
        bound = 1.0 / jnp.sqrt(jnp.float32(fan_in))
        w = jax.random.uniform(kw, (fan_in, fan_out), jnp.float32, -bound, bound)
        b = jax.random.uniform(kb, (1, fan_out), jnp.float32, -bound, bound)
        return w, b

    k1, k2, k3 = jax.random.split(key, 3)
    w1, b1 = linear(k1, features, HIDDEN)
    w2, b2 = linear(k2, HIDDEN, HIDDEN)
    w3, b3 = linear(k3, HIDDEN, targets)
    return {"w1": w1, "b1": b1, "w2": w2, "b2": b2, "w3": w3, "b3": b3}


def reference_forward(x, p):
    h1 = jnp.maximum(x @ p["w1"] + p["b1"], 0.0)
    h2 = jnp.maximum(h1 @ p["w2"] + p["b2"], 0.0)
    return h2 @ p["w3"] + p["b3"]


if __name__ == "__main__":
    key = jax.random.PRNGKey(0)
    k_params, k_x = jax.random.split(key)

    batch, features, targets = 8, 16, 4
    params = init_params(k_params, features, targets)
    x = jax.random.normal(k_x, (batch, features), jnp.float32)

    out = pump_frequency_forward(x, params)
    out = jax.block_until_ready(out)

    ref = reference_forward(x, params)
    assert out.shape == (batch, targets)
    # f32 data with MXU default-precision accumulation -> modest tolerance.
    max_err = float(jnp.max(jnp.abs(out - ref)))
    assert jnp.allclose(out, ref, atol=3e-2, rtol=3e-2), f"mismatch: {max_err}"

    print("KERNEL_OK")
</pallas_src>

<mosaic_0001>
module attributes {stable_mosaic.version = 11 : i64} {
  func.func @_mlp_kernel(%arg0: i32, %arg1: memref<8x16xf32, #tpu.memory_space<vmem>>, %arg2: memref<16x64xf32, #tpu.memory_space<vmem>>, %arg3: memref<1x64xf32, #tpu.memory_space<vmem>>, %arg4: memref<64x64xf32, #tpu.memory_space<vmem>>, %arg5: memref<1x64xf32, #tpu.memory_space<vmem>>, %arg6: memref<64x4xf32, #tpu.memory_space<vmem>>, %arg7: memref<1x4xf32, #tpu.memory_space<vmem>>, %arg8: memref<8x4xf32, #tpu.memory_space<vmem>>) attributes {dimension_semantics = [#tpu.dimension_semantics<parallel>], iteration_bounds = array<i64: 1>, scalar_prefetch = 0 : i64, scratch_operands = 0 : i64, tpu.core_type = #tpu.core_type<tc>, window_params = [{transform_indices = @transform_0, window_bounds = array<i64: 8, 16>}, {pipeline_mode = #tpu.pipeline_mode<synchronous>, transform_indices = @transform_1, window_bounds = array<i64: 16, 64>}, {pipeline_mode = #tpu.pipeline_mode<synchronous>, transform_indices = @transform_2, window_bounds = array<i64: 1, 64>}, {pipeline_mode = #tpu.pipeline_mode<synchronous>, transform_indices = @transform_3, window_bounds = array<i64: 64, 64>}, {pipeline_mode = #tpu.pipeline_mode<synchronous>, transform_indices = @transform_4, window_bounds = array<i64: 1, 64>}, {pipeline_mode = #tpu.pipeline_mode<synchronous>, transform_indices = @transform_5, window_bounds = array<i64: 64, 4>}, {pipeline_mode = #tpu.pipeline_mode<synchronous>, transform_indices = @transform_6, window_bounds = array<i64: 1, 4>}, {transform_indices = @transform_7, window_bounds = array<i64: 8, 4>}]} {
    %c0 = arith.constant 0 : index
    %c0_0 = arith.constant 0 : index
    %0 = vector.load %arg1[%c0, %c0_0] : memref<8x16xf32, #tpu.memory_space<vmem>>, vector<8x16xf32>
    %c0_1 = arith.constant 0 : index
    %c0_2 = arith.constant 0 : index
    %1 = vector.load %arg2[%c0_1, %c0_2] : memref<16x64xf32, #tpu.memory_space<vmem>>, vector<16x64xf32>
    %cst = arith.constant dense<0.000000e+00> : vector<8x64xf32>
    %2 = tpu.matmul %0, %1, %cst {dimension_numbers = #tpu.dot_dimension_numbers<[1], [0], [0], [1], [0, 0, 1, 1], [], []>} : vector<8x16xf32>, vector<16x64xf32>, vector<8x64xf32> -> vector<8x64xf32>
    %c0_3 = arith.constant 0 : index
    %c0_4 = arith.constant 0 : index
    %3 = vector.load %arg3[%c0_3, %c0_4] : memref<1x64xf32, #tpu.memory_space<vmem>>, vector<1x64xf32>
    %4 = vector.broadcast %3 : vector<1x64xf32> to vector<8x64xf32>
    %5 = arith.addf %2, %4 : vector<8x64xf32>
    %cst_5 = arith.constant 0.000000e+00 : f32
    %6 = vector.broadcast %cst_5 : f32 to vector<8x64xf32>
    %7 = arith.maximumf %5, %6 : vector<8x64xf32>
    %c0_6 = arith.constant 0 : index
    %c0_7 = arith.constant 0 : index
    %8 = vector.load %arg4[%c0_6, %c0_7] : memref<64x64xf32, #tpu.memory_space<vmem>>, vector<64x64xf32>
    %cst_8 = arith.constant dense<0.000000e+00> : vector<8x64xf32>
    %9 = tpu.matmul %7, %8, %cst_8 {dimension_numbers = #tpu.dot_dimension_numbers<[1], [0], [0], [1], [0, 0, 1, 1], [], []>} : vector<8x64xf32>, vector<64x64xf32>, vector<8x64xf32> -> vector<8x64xf32>
    %c0_9 = arith.constant 0 : index
    %c0_10 = arith.constant 0 : index
    %10 = vector.load %arg5[%c0_9, %c0_10] : memref<1x64xf32, #tpu.memory_space<vmem>>, vector<1x64xf32>
    %11 = vector.broadcast %10 : vector<1x64xf32> to vector<8x64xf32>
    %12 = arith.addf %9, %11 : vector<8x64xf32>
    %cst_11 = arith.constant 0.000000e+00 : f32
    %13 = vector.broadcast %cst_11 : f32 to vector<8x64xf32>
    %14 = arith.maximumf %12, %13 : vector<8x64xf32>
    %c0_12 = arith.constant 0 : index
    %c0_13 = arith.constant 0 : index
    %15 = vector.load %arg6[%c0_12, %c0_13] : memref<64x4xf32, #tpu.memory_space<vmem>>, vector<64x4xf32>
    %cst_14 = arith.constant dense<0.000000e+00> : vector<8x4xf32>
    %16 = tpu.matmul %14, %15, %cst_14 {dimension_numbers = #tpu.dot_dimension_numbers<[1], [0], [0], [1], [0, 0, 1, 1], [], []>} : vector<8x64xf32>, vector<64x4xf32>, vector<8x4xf32> -> vector<8x4xf32>
    %c0_15 = arith.constant 0 : index
    %c0_16 = arith.constant 0 : index
    %17 = vector.load %arg7[%c0_15, %c0_16] : memref<1x4xf32, #tpu.memory_space<vmem>>, vector<1x4xf32>
    %18 = vector.broadcast %17 : vector<1x4xf32> to vector<8x4xf32>
    %19 = arith.addf %16, %18 : vector<8x4xf32>
    %c0_17 = arith.constant 0 : index
    %c0_18 = arith.constant 0 : index
    %20 = vector.load %arg8[%c0_17, %c0_18] : memref<8x4xf32, #tpu.memory_space<vmem>>, vector<8x4xf32>
    tpu.vector_store %arg8[%c0_17, %c0_18], %19 {strides = array<i32>} : memref<8x4xf32, #tpu.memory_space<vmem>>, vector<8x4xf32>,
    return
  }
  func.func @transform_0(%arg0: i32) -> (i32, i32) {
    %c0_i32 = arith.constant 0 : i32
    %c0_i32_0 = arith.constant 0 : i32
    return %arg0, %c0_i32 : i32, i32
  }
  func.func @transform_1(%arg0: i32) -> (i32, i32) {
    %c0_i32 = arith.constant 0 : i32
    %c0_i32_0 = arith.constant 0 : i32
    %c0_i32_1 = arith.constant 0 : i32
    return %c0_i32, %c0_i32_0 : i32, i32
  }
  func.func @transform_2(%arg0: i32) -> (i32, i32) {
    %c0_i32 = arith.constant 0 : i32
    %c0_i32_0 = arith.constant 0 : i32
    %c0_i32_1 = arith.constant 0 : i32
    return %c0_i32, %c0_i32_0 : i32, i32
  }
  func.func @transform_3(%arg0: i32) -> (i32, i32) {
    %c0_i32 = arith.constant 0 : i32
    %c0_i32_0 = arith.constant 0 : i32
    %c0_i32_1 = arith.constant 0 : i32
    return %c0_i32, %c0_i32_0 : i32, i32
  }
  func.func @transform_4(%arg0: i32) -> (i32, i32) {
    %c0_i32 = arith.constant 0 : i32
    %c0_i32_0 = arith.constant 0 : i32
    %c0_i32_1 = arith.constant 0 : i32
    return %c0_i32, %c0_i32_0 : i32, i32
  }
  func.func @transform_5(%arg0: i32) -> (i32, i32) {
    %c0_i32 = arith.constant 0 : i32
    %c0_i32_0 = arith.constant 0 : i32
    %c0_i32_1 = arith.constant 0 : i32
    return %c0_i32, %c0_i32_0 : i32, i32
  }
  func.func @transform_6(%arg0: i32) -> (i32, i32) {
    %c0_i32 = arith.constant 0 : i32
    %c0_i32_0 = arith.constant 0 : i32
    %c0_i32_1 = arith.constant 0 : i32
    return %c0_i32, %c0_i32_0 : i32, i32
  }
  func.func @transform_7(%arg0: i32) -> (i32, i32) {
    %c0_i32 = arith.constant 0 : i32
    %c0_i32_0 = arith.constant 0 : i32
    return %arg0, %c0_i32 : i32, i32
  }
}

</mosaic_0001>

<llo_original>
// kernel: pump_frequency_forward.1
$region0: #{pump_frequency_forward.1}
  #allocation0 [shape = 'u32[]', space=smem, size = 0x4, offset = 0x4, fixed_abs, tag = 'smem constant byte address 0x4 - core index']
  #allocation1 [shape = 'u32[144,128]{1,0:T(1,128)}', space=vmem, size = 0x12000, scoped, tag = 'internal scratch']
  %s0 = inlined_call_operand.vmem [shape: f32[8,16], index: 0, kind: input, shape index: {}]
  %s1 = inlined_call_operand.hbm [shape: f32[16,64], index: 1, kind: input, shape index: {}]
  %s2 = inlined_call_operand.vmem [shape: f32[1,64], index: 2, kind: input, shape index: {}]
  %s3 = inlined_call_operand.vmem [shape: f32[64,64], index: 3, kind: input, shape index: {}]
  %s4 = inlined_call_operand.vmem [shape: f32[1,64], index: 4, kind: input, shape index: {}]
  %s5 = inlined_call_operand.vmem [shape: f32[64,4], index: 5, kind: input, shape index: {}]
  %s6 = inlined_call_operand.hbm [shape: f32[1,4], index: 6, kind: input, shape index: {}]
  %s7 = inlined_call_operand.vmem [shape: f32[8,4], index: 7, kind: output, shape index: {}]
  %s8 = sld [smem:[#allocation0]]
  $region46: #{pump_frequency_forward.1} parent=0
    _
  %s10 = ssub.s32 1, %s8
  %s11 = scalar_select 0, %s10, %s8
  $region1: #{pump_frequency_forward.1} parent=0
    #allocation2 [shape = 'u8[8192]{0}', space=vmem, size = 0x2000, scoped, tag = 'input window, operand 1, single buffered']
    #allocation3 [shape = 's32[1]{0}', space=sflag, size = 0x4, scoped, tag = 'scoped memory for pump_frequency_forward.1']
    #allocation4 [shape = 'u8[512]{0}', space=vmem, size = 0x400, scoped, tag = 'input window, operand 6, single buffered']
    #allocation5 [shape = 's32[1]{0}', space=sflag, size = 0x4, scoped, tag = 'scoped memory for pump_frequency_forward.1']
    %12 = vsyncpa [#allocation3], 0
    %13 = vsyncpa [#allocation5], 0
    // Predicated region
    $region2: #{pump_frequency_forward.1} parent=1 // pred_check
      _
    $region3: #{pump_frequency_forward.1} parent=1 // pred_check_branch
      %15 = sbr.rel (0) target = $region5
    $region4: #{pump_frequency_forward.1} parent=1 // pred_region
      _
    $region5: #{pump_frequency_forward.1} parent=1 // pred_fallthru
      _
    // Predicated region
    $region6: #{pump_frequency_forward.1} parent=1 // pred_check
      _
    $region7: #{pump_frequency_forward.1} parent=1 // pred_check_branch
      %17 = sbr.rel (0) target = $region9
    $region8: #{pump_frequency_forward.1} parent=1 // pred_region
      %s19 = ssub.s32 256, 256
      %20 = vsyncadd [#allocation3], %s19
      %s21 = sshll.u32 [#allocation2], 4
      %s22 = int_to_ptr.vmem [resolvable:$true] %s21
      %27 = dma.hbm_to_vmem [thread:$0]  %s1, 256, %s22, [#allocation3], 128, 128, 8
    $region9: #{pump_frequency_forward.1} parent=1 // pred_fallthru
      _
    // Predicated region
    $region10: #{pump_frequency_forward.1} parent=1 // pred_check
      _
    $region11: #{pump_frequency_forward.1} parent=1 // pred_check_branch
      %29 = sbr.rel (0) target = $region13
    $region12: #{pump_frequency_forward.1} parent=1 // pred_region
      _
    $region13: #{pump_frequency_forward.1} parent=1 // pred_fallthru
      _
    // Predicated region
    $region14: #{pump_frequency_forward.1} parent=1 // pred_check
      _
    $region15: #{pump_frequency_forward.1} parent=1 // pred_check_branch
      %31 = sbr.rel (0) target = $region17
    $region16: #{pump_frequency_forward.1} parent=1 // pred_region
      _
    $region17: #{pump_frequency_forward.1} parent=1 // pred_fallthru
      _
    // Predicated region
    $region18: #{pump_frequency_forward.1} parent=1 // pred_check
      _
    $region19: #{pump_frequency_forward.1} parent=1 // pred_check_branch
      %33 = sbr.rel (0) target = $region21
    $region20: #{pump_frequency_forward.1} parent=1 // pred_region
      _
    $region21: #{pump_frequency_forward.1} parent=1 // pred_fallthru
      _
    // Predicated region
    $region22: #{pump_frequency_forward.1} parent=1 // pred_check
      _
    $region23: #{pump_frequency_forward.1} parent=1 // pred_check_branch
      %35 = sbr.rel (0) target = $region25
    $region24: #{pump_frequency_forward.1} parent=1 // pred_region
      _
    $region25: #{pump_frequency_forward.1} parent=1 // pred_fallthru
      _
    // Predicated region
    $region26: #{pump_frequency_forward.1} parent=1 // pred_check
      _
    $region27: #{pump_frequency_forward.1} parent=1 // pred_check_branch
      %37 = sbr.rel (0) target = $region29
    $region28: #{pump_frequency_forward.1} parent=1 // pred_region
      %s39 = ssub.s32 16, 16
      %40 = vsyncadd [#allocation5], %s39
      %s42 = sshll.u32 [#allocation4], 4
      %s43 = int_to_ptr.vmem [resolvable:$true] %s42
      %45 = dma.hbm_to_vmem [thread:$0]  %s6, 16, %s43, [#allocation5]
    $region29: #{pump_frequency_forward.1} parent=1 // pred_fallthru
      _
    // Predicated region
    $region30: #{pump_frequency_forward.1} parent=1 // pred_check
      _
    $region31: #{pump_frequency_forward.1} parent=1 // pred_check_branch
      %47 = sbr.rel (0) target = $region33
    $region32: #{pump_frequency_forward.1} parent=1 // pred_region
      %48 = dma.done [#allocation3], 256
    $region33: #{pump_frequency_forward.1} parent=1 // pred_fallthru
      _
    // Predicated region
    $region34: #{pump_frequency_forward.1} parent=1 // pred_check
      _
    $region35: #{pump_frequency_forward.1} parent=1 // pred_check_branch
      %50 = sbr.rel (0) target = $region37
    $region36: #{pump_frequency_forward.1} parent=1 // pred_region
      %51 = dma.done [#allocation5], 16
    $region37: #{pump_frequency_forward.1} parent=1 // pred_fallthru
      _
    %v52 = vld [vmem:[%s0] sm:$0xff]
    %v53 = vld [vmem:[#allocation2] sm:$0xff]
    %v54 = vld [vmem:[#allocation2 + $0x8] sm:$0xff]
    %v55 = vld [vmem:[%s2] sm:$0x1]
    %v57 = vlaneseq
    %v58 = vshrl.u32 %v57, 7
    %v59 = vsub.s32 0, %v58
    %v60 = vrot.slane %v55, %v59
    %vm62 = vcmask 130048
    %v64 = vsel %vm62, %v52, 0
    %66 = vmatprep.subr.mxu0 0.0
    %67 = vmatpush1.msra.mxu0 0.0
    %68 = vmatprep.subr.mxu0 0.0
    %69 = vmatpush1.msra.mxu0 0.0
    %70 = vmatprep.subr.mxu0 0.0
    %71 = vmatpush1.msra.mxu0 0.0
    %72 = vmatprep.subr.mxu0 0.0
    %73 = vmatpush1.msra.mxu0 0.0
    %74 = vmatprep.subr.mxu0 0.0
    %75 = vmatpush1.msra.mxu0 0.0
    %76 = vmatprep.subr.mxu0 0.0
    %77 = vmatpush1.msra.mxu0 0.0
    %78 = vmatprep.subr.mxu0 0.0
    %79 = vmatpush1.msra.mxu0 0.0
    %80 = vmatprep.subr.mxu0 0.0
    %81 = vmatpush1.msra.mxu0 0.0
    %82 = vmatprep.subr.mxu0 0.0
    %83 = vmatpush1.msra.mxu0 0.0
    %84 = vmatprep.subr.mxu0 0.0
    %85 = vmatpush1.msra.mxu0 0.0
    %86 = vmatprep.subr.mxu0 0.0
    %87 = vmatpush1.msra.mxu0 0.0
    %88 = vmatprep.subr.mxu0 0.0
    %89 = vmatpush1.msra.mxu0 0.0
    %90 = vmatprep.subr.mxu0 0.0
    %91 = vmatpush1.msra.mxu0 0.0
    %92 = vmatprep.subr.mxu0 0.0
    %93 = vmatpush1.msra.mxu0 0.0
    %94 = vmatprep.subr.mxu0 0.0
    %95 = vmatpush1.msra.mxu0 %v54
    %96 = vmatprep.subr.mxu0 0.0
    %97 = vmatpush1.msra.mxu0 %v53
    %98 = vmatprep.subr.mxu0 0.0
    %99 = vmatpush2.msra.mxu0 0.0
    %100 = vmatprep.subr.mxu0 0.0
    %101 = vmatpush2.msra.mxu0 0.0
    %102 = vmatprep.subr.mxu0 0.0
    %103 = vmatpush2.msra.mxu0 0.0
    %104 = vmatprep.subr.mxu0 0.0
    %105 = vmatpush2.msra.mxu0 0.0
    %106 = vmatprep.subr.mxu0 0.0
    %107 = vmatpush2.msra.mxu0 0.0
    %108 = vmatprep.subr.mxu0 0.0
    %109 = vmatpush2.msra.mxu0 0.0
    %110 = vmatprep.subr.mxu0 0.0
    %111 = vmatpush2.msra.mxu0 0.0
    %112 = vmatprep.subr.mxu0 0.0
    %113 = vmatpush2.msra.mxu0 0.0
    %114 = vmatprep.subr.mxu0 0.0
    %115 = vmatpush2.msra.mxu0 0.0
    %116 = vmatprep.subr.mxu0 0.0
    %117 = vmatpush2.msra.mxu0 0.0
    %118 = vmatprep.subr.mxu0 0.0
    %119 = vmatpush2.msra.mxu0 0.0
    %120 = vmatprep.subr.mxu0 0.0
    %121 = vmatpush2.msra.mxu0 0.0
    %122 = vmatprep.subr.mxu0 0.0
    %123 = vmatpush2.msra.mxu0 0.0
    %124 = vmatprep.subr.mxu0 0.0
    %125 = vmatpush2.msra.mxu0 0.0
    %126 = vmatprep.subr.mxu0 0.0
    %127 = vmatpush2.msra.mxu0 0.0
    %128 = vmatprep.subr.mxu0 0.0
    %129 = vmatpush2.msra.mxu0 0.0
    %130 = vmatprep.mubr.f32.mxu0 0.0
    %131 = vmatmul.mubr.f32.gmra.mxu0 %v64
    %v132 = vpop.f32.mrf.mxu0
    %v133 = vadd.f32 %v60, %v132
    %v134 = vpop.f32.mrf.mxu0
    %135 = vdwg.mxu0
    %v136 = vmax.f32 %v133, 0.0
    %v137 = vld [vmem:[%s3] sm:$0xff]
    %v138 = vld [vmem:[%s3 + $0x8] sm:$0xff]
    %v139 = vld [vmem:[%s3 + $0x10] sm:$0xff]
    %v140 = vld [vmem:[%s3 + $0x18] sm:$0xff]
    %v141 = vld [vmem:[%s3 + $0x20] sm:$0xff]
    %v142 = vld [vmem:[%s3 + $0x28] sm:$0xff]
    %v143 = vld [vmem:[%s3 + $0x30] sm:$0xff]
    %v144 = vld [vmem:[%s3 + $0x38] sm:$0xff]
    %v145 = vld [vmem:[%s4] sm:$0x1]
    %v147 = vlaneseq
    %v148 = vshrl.u32 %v147, 7
    %v149 = vsub.s32 0, %v148
    %v150 = vrot.slane %v145, %v149
    %vm152 = vcmask 523264
    %v154 = vsel %vm152, %v136, 0
    %156 = vmatprep.subr.mxu0 0.0
    %157 = vmatpush1.msra.mxu0 0.0
    %158 = vmatprep.subr.mxu0 0.0
    %159 = vmatpush1.msra.mxu0 0.0
    %160 = vmatprep.subr.mxu0 0.0
    %161 = vmatpush1.msra.mxu0 0.0
    %162 = vmatprep.subr.mxu0 0.0
    %163 = vmatpush1.msra.mxu0 0.0
    %164 = vmatprep.subr.mxu0 0.0
    %165 = vmatpush1.msra.mxu0 0.0
    %166 = vmatprep.subr.mxu0 0.0
    %167 = vmatpush1.msra.mxu0 0.0
    %168 = vmatprep.subr.mxu0 0.0
    %169 = vmatpush1.msra.mxu0 0.0
    %170 = vmatprep.subr.mxu0 0.0
    %171 = vmatpush1.msra.mxu0 0.0
    %172 = vmatprep.subr.mxu0 0.0
    %173 = vmatpush1.msra.mxu0 %v144
    %174 = vmatprep.subr.mxu0 0.0
    %175 = vmatpush1.msra.mxu0 %v143
    %176 = vmatprep.subr.mxu0 0.0
    %177 = vmatpush1.msra.mxu0 %v142
    %178 = vmatprep.subr.mxu0 0.0
    %179 = vmatpush1.msra.mxu0 %v141
    %180 = vmatprep.subr.mxu0 0.0
    %181 = vmatpush1.msra.mxu0 %v140
    %182 = vmatprep.subr.mxu0 0.0
    %183 = vmatpush1.msra.mxu0 %v139
    %184 = vmatprep.subr.mxu0 0.0
    %185 = vmatpush1.msra.mxu0 %v138
    %186 = vmatprep.subr.mxu0 0.0
    %187 = vmatpush1.msra.mxu0 %v137
    %188 = vmatprep.subr.mxu0 0.0
    %189 = vmatpush2.msra.mxu0 0.0
    %190 = vmatprep.subr.mxu0 0.0
    %191 = vmatpush2.msra.mxu0 0.0
    %192 = vmatprep.subr.mxu0 0.0
    %193 = vmatpush2.msra.mxu0 0.0
    %194 = vmatprep.subr.mxu0 0.0
    %195 = vmatpush2.msra.mxu0 0.0
    %196 = vmatprep.subr.mxu0 0.0
    %197 = vmatpush2.msra.mxu0 0.0
    %198 = vmatprep.subr.mxu0 0.0
    %199 = vmatpush2.msra.mxu0 0.0
    %200 = vmatprep.subr.mxu0 0.0
    %201 = vmatpush2.msra.mxu0 0.0
    %202 = vmatprep.subr.mxu0 0.0
    %203 = vmatpush2.msra.mxu0 0.0
    %204 = vmatprep.subr.mxu0 0.0
    %205 = vmatpush2.msra.mxu0 0.0
    %206 = vmatprep.subr.mxu0 0.0
    %207 = vmatpush2.msra.mxu0 0.0
    %208 = vmatprep.subr.mxu0 0.0
    %209 = vmatpush2.msra.mxu0 0.0
    %210 = vmatprep.subr.mxu0 0.0
    %211 = vmatpush2.msra.mxu0 0.0
    %212 = vmatprep.subr.mxu0 0.0
    %213 = vmatpush2.msra.mxu0 0.0
    %214 = vmatprep.subr.mxu0 0.0
    %215 = vmatpush2.msra.mxu0 0.0
    %216 = vmatprep.subr.mxu0 0.0
    %217 = vmatpush2.msra.mxu0 0.0
    %218 = vmatprep.subr.mxu0 0.0
    %219 = vmatpush2.msra.mxu0 0.0
    %220 = vmatprep.mubr.f32.mxu0 0.0
    %221 = vmatmul.mubr.f32.gmra.mxu0 %v154
    %v222 = vpop.f32.mrf.mxu0
    %v223 = vadd.f32 %v150, %v222
    %v224 = vpop.f32.mrf.mxu0
    %225 = vdwg.mxu0
    %v226 = vmax.f32 %v223, 0.0
    %v227 = vld [vmem:[%s5] sm:$0xff]
    %v228 = vld [vmem:[%s5 + $0x8] sm:$0xff]
    %v229 = vld [vmem:[%s5 + $0x10] sm:$0xff]
    %v230 = vld [vmem:[%s5 + $0x18] sm:$0xff]
    %v231 = vld [vmem:[%s5 + $0x20] sm:$0xff]
    %v232 = vld [vmem:[%s5 + $0x28] sm:$0xff]
    %v233 = vld [vmem:[%s5 + $0x30] sm:$0xff]
    %v234 = vld [vmem:[%s5 + $0x38] sm:$0xff]
    %v235 = vld [vmem:[#allocation4] sm:$0x1]
    %v237 = vlaneseq
    %v238 = vshrl.u32 %v237, 7
    %v239 = vsub.s32 0, %v238
    %v240 = vrot.slane %v235, %v239
    %v243 = vsel %vm152, %v226, 0
    %245 = vmatprep.subr.mxu0 0.0
    %246 = vmatpush1.msra.mxu0 0.0
    %247 = vmatprep.subr.mxu0 0.0
    %248 = vmatpush1.msra.mxu0 0.0
    %249 = vmatprep.subr.mxu0 0.0
    %250 = vmatpush1.msra.mxu0 0.0
    %251 = vmatprep.subr.mxu0 0.0
    %252 = vmatpush1.msra.mxu0 0.0
    %253 = vmatprep.subr.mxu0 0.0
    %254 = vmatpush1.msra.mxu0 0.0
    %255 = vmatprep.subr.mxu0 0.0
    %256 = vmatpush1.msra.mxu0 0.0
    %257 = vmatprep.subr.mxu0 0.0
    %258 = vmatpush1.msra.mxu0 0.0
    %259 = vmatprep.subr.mxu0 0.0
    %260 = vmatpush1.msra.mxu0 0.0
    %261 = vmatprep.subr.mxu0 0.0
    %262 = vmatpush1.msra.mxu0 %v234
    %263 = vmatprep.subr.mxu0 0.0
    %264 = vmatpush1.msra.mxu0 %v233
    %265 = vmatprep.subr.mxu0 0.0
    %266 = vmatpush1.msra.mxu0 %v232
    %267 = vmatprep.subr.mxu0 0.0
    %268 = vmatpush1.msra.mxu0 %v231
    %269 = vmatprep.subr.mxu0 0.0
    %270 = vmatpush1.msra.mxu0 %v230
    %271 = vmatprep.subr.mxu0 0.0
    %272 = vmatpush1.msra.mxu0 %v229
    %273 = vmatprep.subr.mxu0 0.0
    %274 = vmatpush1.msra.mxu0 %v228
    %275 = vmatprep.subr.mxu0 0.0
    %276 = vmatpush1.msra.mxu0 %v227
    %277 = vmatprep.subr.mxu0 0.0
    %278 = vmatpush2.msra.mxu0 0.0
    %279 = vmatprep.subr.mxu0 0.0
    %280 = vmatpush2.msra.mxu0 0.0
    %281 = vmatprep.subr.mxu0 0.0
    %282 = vmatpush2.msra.mxu0 0.0
    %283 = vmatprep.subr.mxu0 0.0
    %284 = vmatpush2.msra.mxu0 0.0
    %285 = vmatprep.subr.mxu0 0.0
    %286 = vmatpush2.msra.mxu0 0.0
    %287 = vmatprep.subr.mxu0 0.0
    %288 = vmatpush2.msra.mxu0 0.0
    %289 = vmatprep.subr.mxu0 0.0
    %290 = vmatpush2.msra.mxu0 0.0
    %291 = vmatprep.subr.mxu0 0.0
    %292 = vmatpush2.msra.mxu0 0.0
    %293 = vmatprep.subr.mxu0 0.0
    %294 = vmatpush2.msra.mxu0 0.0
    %295 = vmatprep.subr.mxu0 0.0
    %296 = vmatpush2.msra.mxu0 0.0
    %297 = vmatprep.subr.mxu0 0.0
    %298 = vmatpush2.msra.mxu0 0.0
    %299 = vmatprep.subr.mxu0 0.0
    %300 = vmatpush2.msra.mxu0 0.0
    %301 = vmatprep.subr.mxu0 0.0
    %302 = vmatpush2.msra.mxu0 0.0
    %303 = vmatprep.subr.mxu0 0.0
    %304 = vmatpush2.msra.mxu0 0.0
    %305 = vmatprep.subr.mxu0 0.0
    %306 = vmatpush2.msra.mxu0 0.0
    %307 = vmatprep.subr.mxu0 0.0
    %308 = vmatpush2.msra.mxu0 0.0
    %309 = vmatprep.mubr.f32.mxu0 0.0
    %310 = vmatmul.mubr.f32.gmra.mxu0 %v243
    %v311 = vpop.f32.mrf.mxu0
    %v312 = vadd.f32 %v240, %v311
    %v313 = vpop.f32.mrf.mxu0
    %314 = vdwg.mxu0
    %vm315 = vcmask 31744
    %316 = vst.msk [vmem:[%s7] sm:$0xff] %vm315, %v312
    // Predicated region
    $region38: #{pump_frequency_forward.1} parent=1 // pred_check
      _
    $region39: #{pump_frequency_forward.1} parent=1 // pred_check_branch
      %318 = sbr.rel (0) target = $region41
    $region40: #{pump_frequency_forward.1} parent=1 // pred_region
      _
    $region41: #{pump_frequency_forward.1} parent=1 // pred_fallthru
      _
    // Predicated region
    $region42: #{pump_frequency_forward.1} parent=1 // pred_check
      _
    $region43: #{pump_frequency_forward.1} parent=1 // pred_check_branch
      %320 = sbr.rel (0) target = $region45
    $region44: #{pump_frequency_forward.1} parent=1 // pred_region
      _
    $region45: #{pump_frequency_forward.1} parent=1 // pred_fallthru
      _
    %321 = vsyncpa [#allocation3], 1
    %322 = vsyncpa [#allocation5], 1

</llo_original>
